<compile_context>
chip_gen: v7x
topology: tpu7x:2x2x1
jax: 0.10.0
libtpu: 0.0.40
codegen_flags: <defaults>
</compile_context>

<pallas_src>
import functools
import math

import jax
import jax.numpy as jnp
from jax import lax
from jax.experimental import pallas as pl
from jax.experimental.pallas import tpu as pltpu

EPS = 1e-5


def _round_up(x, m):
    return (x + m - 1) // m * m


def _is_v5e():
    try:
        kind = jax.devices()[0].device_kind.lower()
        return ("v5 lite" in kind) or ("v5e" in kind) or ("v5litepod" in kind)
    except Exception:
        return False


def _vmem_limit_bytes():
    # ~3/4 of physical VMEM (48 MiB on v7x, 96 MiB on v5e/v6e); fall back to
    # the compiler default if the query is unavailable.
    try:
        phys = pltpu.get_tpu_info().vmem_capacity_bytes
        if isinstance(phys, int) and phys >= 32 * 1024 * 1024:
            return min(int(phys) * 3 // 4, 96 * 1024 * 1024)
    except Exception:
        pass
    return None


def _compiler_params(dimension_semantics):
    return pltpu.CompilerParams(
        dimension_semantics=dimension_semantics,
        vmem_limit_bytes=_vmem_limit_bytes(),
    )


def _conv_stats_kernel(lhs_ref, w_ref, y_ref, stat_ref):
    """Phase 1: one big-K MXU matmul per tile + partial BN statistics."""
    acc = jnp.dot(lhs_ref[...], w_ref[...], preferred_element_type=jnp.float32)
    y_ref[...] = acc.astype(y_ref.dtype)                    # bf16 intermediate
    ssum = jnp.sum(acc, axis=0, keepdims=True)              # (1, TN)
    ssq = jnp.sum(acc * acc, axis=0, keepdims=True)         # (1, TN)
    stat_ref[0] = jnp.concatenate([ssum, ssq], axis=0)      # one stacked store


def _bn_relu_kernel(y_ref, scale_ref, shift_ref, o_ref):
    """Phase 2: per-channel affine (folded BN) + ReLU, lane-dense tiles."""
    y = y_ref[...].astype(jnp.float32)
    o_ref[...] = jnp.maximum(y * scale_ref[...] + shift_ref[...], 0.0)


def basic_conv2d(x_nchw, weight_oihw, *, stride=1, padding=0, dilation=1,
                 gamma=None, beta=None, eps=EPS):
    """Forward of BasicConv2d. x: NCHW f32, weight: (Cout, Cin, KH, KW)."""
    n, cin, h, w = x_nchw.shape
    cout, cin_w, kh, kw = weight_oihw.shape
    assert cin == cin_w, (cin, cin_w)

    ho = (h + 2 * padding - dilation * (kh - 1) - 1) // stride + 1
    wo = (w + 2 * padding - dilation * (kw - 1) - 1) // stride + 1
    assert ho > 0 and wo > 0

    k_dim = kh * kw * cin                       # MXU contraction depth
    c_pad = _round_up(cout, 128)                # lane-dense output channels
    m_total = n * ho * wo                       # merged (N, Ho, Wo) row axis

    # ---- lane-dense im2col packing (wrapper-side layout plumbing) ----------
    x_nhwc = jnp.transpose(x_nchw, (0, 2, 3, 1)).astype(jnp.float32)
    x_sp = jnp.pad(x_nhwc, ((0, 0), (padding, padding), (padding, padding), (0, 0)))
    cols = []
    for i in range(kh):
        for j in range(kw):
            win = lax.slice(
                x_sp,
                (0, i * dilation, j * dilation, 0),
                (n, i * dilation + (ho - 1) * stride + 1,
                    j * dilation + (wo - 1) * stride + 1, cin),
                (1, stride, stride, 1))
            cols.append(win)                                   # (N, Ho, Wo, Cin)
    patches = jnp.concatenate(cols, axis=-1).reshape(m_total, k_dim)

    # ---- tile sizes ---------------------------------------------------------
    v5e = _is_v5e()
    tm = 512                                    # output rows per conv tile
    while tm > 8 and _round_up(m_total, tm) // tm < 2:
        tm //= 2                                # keep >=2 tiles (megacore balance)
    m_pad = _round_up(m_total, tm)
    n_m = m_pad // tm

    w_bytes = k_dim * c_pad * 2
    max_full = 128 if v5e else 512
    if c_pad <= max_full and w_bytes <= 4 * 1024 * 1024:
        tn = c_pad                              # full-Cout, VMEM-resident weight
    elif (not v5e) and c_pad % 256 == 0:
        tn = 256
    else:
        tn = 128
    n_co = c_pad // tn

    patches = jnp.pad(patches, ((0, m_pad - m_total), (0, 0))).astype(jnp.bfloat16)
    w_k = jnp.transpose(weight_oihw, (2, 3, 1, 0)).reshape(k_dim, cout)
    w_k = jnp.pad(w_k, ((0, 0), (0, c_pad - cout))).astype(jnp.bfloat16)

    # ---- phase 1: tiled matmul (K = KH*KW*Cin) + partial BN stats ----------
    if n_co == 1:
        grid = (n_m,)
        lhs_spec = pl.BlockSpec((tm, k_dim), lambda m: (m, 0))
        w_spec = pl.BlockSpec((k_dim, c_pad), lambda m: (0, 0))   # resident
        y_spec = pl.BlockSpec((tm, c_pad), lambda m: (m, 0))
        st_spec = pl.BlockSpec((1, 2, c_pad), lambda m: (m, 0, 0))
        sem = ("parallel",)
    else:
        # TODO(synk): weight tiles are re-streamed once per M tile on this
        #             (large-Cout) path; an in-kernel Cout loop over a
        #             resident full-Cout block would remove that traffic.
        grid = (n_m, n_co)
        lhs_spec = pl.BlockSpec((tm, k_dim), lambda m, c: (m, 0))
        w_spec = pl.BlockSpec((k_dim, tn), lambda m, c: (0, c))
        y_spec = pl.BlockSpec((tm, tn), lambda m, c: (m, c))
        st_spec = pl.BlockSpec((1, 2, tn), lambda m, c: (m, 0, c))
        sem = ("parallel", "parallel")

    y, stats = pl.pallas_call(
        _conv_stats_kernel,
        out_shape=(
            jax.ShapeDtypeStruct((m_pad, c_pad), jnp.bfloat16),   # bf16 intermediate
            jax.ShapeDtypeStruct((n_m, 2, c_pad), jnp.float32),   # per-tile stats
        ),
        grid=grid,
        in_specs=[lhs_spec, w_spec],
        out_specs=(y_spec, st_spec),
        compiler_params=_compiler_params(sem),
    )(patches, w_k)

    # ---- glue: fold BN (training-mode batch stats) + gamma/beta into a
    # per-channel scale/shift.  Padding rows/channels contribute exactly 0.
    m_real = jnp.float32(m_total)
    ssum = jnp.sum(stats[:, 0, :], axis=0)                     # (C_pad,)
    ssq = jnp.sum(stats[:, 1, :], axis=0)                      # (C_pad,)
    mean = ssum / m_real
    var = jnp.maximum(ssq / m_real - mean * mean, 0.0)         # biased variance
    inv_std = lax.rsqrt(var + eps)

    if gamma is None:
        gamma_p = jnp.ones((c_pad,), jnp.float32)              # fresh BN weight
    else:
        gamma_p = jnp.pad(jnp.asarray(gamma, jnp.float32), (0, c_pad - cout))
    if beta is None:
        beta_p = jnp.zeros((c_pad,), jnp.float32)              # fresh BN bias
    else:
        beta_p = jnp.pad(jnp.asarray(beta, jnp.float32), (0, c_pad - cout))

    scale = (gamma_p * inv_std).reshape(1, c_pad)
    shift = (beta_p - mean * gamma_p * inv_std).reshape(1, c_pad)

    # ---- phase 2: large lane-dense normalize + ReLU tiles -------------------
    g = 1
    while ((g * 2 <= n_m) and (n_m % (g * 2) == 0)
           and (tm * g * 2 <= 2048)
           and (tm * g * 2 * c_pad * 12 <= 12 * 1024 * 1024)):
        g *= 2
    tm2 = tm * g
    n_m2 = m_pad // tm2

    out2 = pl.pallas_call(
        _bn_relu_kernel,
        out_shape=jax.ShapeDtypeStruct((m_pad, c_pad), jnp.float32),
        grid=(n_m2,),
        in_specs=[
            pl.BlockSpec((tm2, c_pad), lambda i: (i, 0)),
            pl.BlockSpec((1, c_pad), lambda i: (0, 0)),
            pl.BlockSpec((1, c_pad), lambda i: (0, 0)),
        ],
        out_specs=pl.BlockSpec((tm2, c_pad), lambda i: (i, 0)),
        compiler_params=_compiler_params(("parallel",)),
    )(y, scale, shift)

    # TODO(synk): returning NHWC would save this final XLA slice+transpose pass.
    out = out2[:m_total].reshape(n, ho, wo, c_pad)[..., :cout]
    return jnp.transpose(out, (0, 3, 1, 2))                    # back to NCHW


def _reference(x_nchw, weight_oihw, *, stride, padding, dilation, eps=EPS):
    """Pure-JAX reference: conv -> BN(batch stats, gamma=1, beta=0) -> ReLU."""
    y = lax.conv_general_dilated(
        x_nchw.astype(jnp.float32), weight_oihw.astype(jnp.float32),
        window_strides=(stride, stride),
        padding=((padding, padding), (padding, padding)),
        rhs_dilation=(dilation, dilation),
        dimension_numbers=("NCHW", "OIHW", "NCHW"),
        precision=lax.Precision.HIGHEST)
    mean = jnp.mean(y, axis=(0, 2, 3), keepdims=True)
    var = jnp.mean((y - mean) ** 2, axis=(0, 2, 3), keepdims=True)
    return jnp.maximum((y - mean) * lax.rsqrt(var + eps), 0.0)


if __name__ == "__main__":
    key = jax.random.PRNGKey(0)
    kx, kw_ = jax.random.split(key)

    # BasicConv2d(in_planes=4, out_planes=8, kernel_size=3, padding=1)
    n, cin, hw = 2, 4, 16
    cout, ksz, stride, padding, dilation = 8, 3, 1, 1, 1

    x = jax.random.normal(kx, (n, cin, hw, hw), jnp.float32)
    fan_in = cin * ksz * ksz                                   # torch default init
    bound = 1.0 / math.sqrt(fan_in)
    weight = jax.random.uniform(kw_, (cout, cin, ksz, ksz), jnp.float32,
                                minval=-bound, maxval=bound)

    run = jax.jit(functools.partial(basic_conv2d, stride=stride,
                                    padding=padding, dilation=dilation))
    y = run(x, weight)
    jax.block_until_ready(y)

    assert y.shape == (n, cout, hw, hw), y.shape
    assert bool(jnp.all(jnp.isfinite(y)))
    assert bool(jnp.all(y >= 0.0))                             # ReLU output

    y_ref = _reference(x, weight, stride=stride, padding=padding,
                       dilation=dilation)
    err = float(jnp.max(jnp.abs(y - y_ref)))
    assert err < 0.1, ("mismatch vs reference", err)

    print("KERNEL_OK")
</pallas_src>

<mosaic_0001>
module attributes {stable_mosaic.version = 11 : i64} {
  func.func @_conv_stats_kernel(%arg0: i32, %arg1: memref<256x36xbf16, #tpu.memory_space<vmem>>, %arg2: memref<36x128xbf16, #tpu.memory_space<vmem>>, %arg3: memref<256x128xbf16, #tpu.memory_space<vmem>>, %arg4: memref<1x2x128xf32, #tpu.memory_space<vmem>>) attributes {dimension_semantics = [#tpu.dimension_semantics<parallel>], iteration_bounds = array<i64: 2>, scalar_prefetch = 0 : i64, scratch_operands = 0 : i64, tpu.core_type = #tpu.core_type<tc>, window_params = [{transform_indices = @transform_0, window_bounds = array<i64: 256, 36>}, {pipeline_mode = #tpu.pipeline_mode<synchronous>, transform_indices = @transform_1, window_bounds = array<i64: 36, 128>}, {transform_indices = @transform_2, window_bounds = array<i64: 256, 128>}, {transform_indices = @transform_3, window_bounds = array<i64: 1, 2, 128>}]} {
    %c0 = arith.constant 0 : index
    %c0_0 = arith.constant 0 : index
    %0 = vector.load %arg1[%c0, %c0_0] : memref<256x36xbf16, #tpu.memory_space<vmem>>, vector<256x36xbf16>
    %c0_1 = arith.constant 0 : index
    %c0_2 = arith.constant 0 : index
    %1 = vector.load %arg2[%c0_1, %c0_2] : memref<36x128xbf16, #tpu.memory_space<vmem>>, vector<36x128xbf16>
    %cst = arith.constant dense<0.000000e+00> : vector<256x128xf32>
    %2 = tpu.matmul %0, %1, %cst {dimension_numbers = #tpu.dot_dimension_numbers<[1], [0], [0], [1], [0, 0, 1, 1], [], []>} : vector<256x36xbf16>, vector<36x128xbf16>, vector<256x128xf32> -> vector<256x128xf32>
    %3 = arith.truncf %2 : vector<256x128xf32> to vector<256x128xbf16>
    %c0_3 = arith.constant 0 : index
    %c0_4 = arith.constant 0 : index
    %4 = vector.load %arg3[%c0_3, %c0_4] : memref<256x128xbf16, #tpu.memory_space<vmem>>, vector<256x128xbf16>
    tpu.vector_store %arg3[%c0_3, %c0_4], %3 {strides = array<i32>} : memref<256x128xbf16, #tpu.memory_space<vmem>>, vector<256x128xbf16>,
    %cst_5 = arith.constant dense<0.000000e+00> : vector<128xf32>
    %5 = vector.multi_reduction <add>, %2, %cst_5 [0] : vector<256x128xf32> to vector<128xf32>
    %6 = vector.shape_cast %5 : vector<128xf32> to vector<1x128xf32>
    %7 = arith.mulf %2, %2 : vector<256x128xf32>
    %cst_6 = arith.constant dense<0.000000e+00> : vector<128xf32>
    %8 = vector.multi_reduction <add>, %7, %cst_6 [0] : vector<256x128xf32> to vector<128xf32>
    %9 = vector.shape_cast %8 : vector<128xf32> to vector<1x128xf32>
    %10 = tpu.concatenate %6, %9 in 0 : vector<1x128xf32>, vector<1x128xf32> -> vector<2x128xf32>
    %c0_7 = arith.constant 0 : index
    %c0_8 = arith.constant 0 : index
    %c0_9 = arith.constant 0 : index
    %11 = vector.load %arg4[%c0_7, %c0_8, %c0_9] : memref<1x2x128xf32, #tpu.memory_space<vmem>>, vector<1x2x128xf32>
    %12 = vector.shape_cast %11 : vector<1x2x128xf32> to vector<2x128xf32>
    %13 = vector.shape_cast %10 : vector<2x128xf32> to vector<1x2x128xf32>
    tpu.vector_store %arg4[%c0_7, %c0_8, %c0_9], %13 {strides = array<i32>} : memref<1x2x128xf32, #tpu.memory_space<vmem>>, vector<1x2x128xf32>,
    return
  }
  func.func @transform_0(%arg0: i32) -> (i32, i32) {
    %c0_i32 = arith.constant 0 : i32
    %c0_i32_0 = arith.constant 0 : i32
    return %arg0, %c0_i32 : i32, i32
  }
  func.func @transform_1(%arg0: i32) -> (i32, i32) {
    %c0_i32 = arith.constant 0 : i32
    %c0_i32_0 = arith.constant 0 : i32
    %c0_i32_1 = arith.constant 0 : i32
    return %c0_i32, %c0_i32_0 : i32, i32
  }
  func.func @transform_2(%arg0: i32) -> (i32, i32) {
    %c0_i32 = arith.constant 0 : i32
    %c0_i32_0 = arith.constant 0 : i32
    return %arg0, %c0_i32 : i32, i32
  }
  func.func @transform_3(%arg0: i32) -> (i32, i32, i32) {
    %c0_i32 = arith.constant 0 : i32
    %c0_i32_0 = arith.constant 0 : i32
    %c0_i32_1 = arith.constant 0 : i32
    return %arg0, %c0_i32, %c0_i32_0 : i32, i32, i32
  }
}

module attributes {stable_mosaic.version = 11 : i64} {
  func.func @_bn_relu_kernel(%arg0: i32, %arg1: memref<512x128xbf16, #tpu.memory_space<vmem>>, %arg2: memref<1x128xf32, #tpu.memory_space<vmem>>, %arg3: memref<1x128xf32, #tpu.memory_space<vmem>>, %arg4: memref<512x128xf32, #tpu.memory_space<vmem>>) attributes {dimension_semantics = [#tpu.dimension_semantics<parallel>], iteration_bounds = array<i64: 1>, scalar_prefetch = 0 : i64, scratch_operands = 0 : i64, tpu.core_type = #tpu.core_type<tc>, window_params = [{transform_indices = @transform_0, window_bounds = array<i64: 512, 128>}, {pipeline_mode = #tpu.pipeline_mode<synchronous>, transform_indices = @transform_1, window_bounds = array<i64: 1, 128>}, {pipeline_mode = #tpu.pipeline_mode<synchronous>, transform_indices = @transform_2, window_bounds = array<i64: 1, 128>}, {transform_indices = @transform_3, window_bounds = array<i64: 512, 128>}]} {
    %c0 = arith.constant 0 : index
    %c0_0 = arith.constant 0 : index
    %0 = vector.load %arg1[%c0, %c0_0] : memref<512x128xbf16, #tpu.memory_space<vmem>>, vector<512x128xbf16>
    %1 = arith.extf %0 : vector<512x128xbf16> to vector<512x128xf32>
    %c0_1 = arith.constant 0 : index
    %c0_2 = arith.constant 0 : index
    %2 = vector.load %arg2[%c0_1, %c0_2] : memref<1x128xf32, #tpu.memory_space<vmem>>, vector<1x128xf32>
    %3 = vector.broadcast %2 : vector<1x128xf32> to vector<512x128xf32>
    %4 = arith.mulf %1, %3 : vector<512x128xf32>
    %c0_3 = arith.constant 0 : index
    %c0_4 = arith.constant 0 : index
    %5 = vector.load %arg3[%c0_3, %c0_4] : memref<1x128xf32, #tpu.memory_space<vmem>>, vector<1x128xf32>
    %6 = vector.broadcast %5 : vector<1x128xf32> to vector<512x128xf32>
    %7 = arith.addf %4, %6 : vector<512x128xf32>
    %cst = arith.constant 0.000000e+00 : f32
    %8 = vector.broadcast %cst : f32 to vector<512x128xf32>
    %9 = arith.maximumf %7, %8 : vector<512x128xf32>
    %c0_5 = arith.constant 0 : index
    %c0_6 = arith.constant 0 : index
    %10 = vector.load %arg4[%c0_5, %c0_6] : memref<512x128xf32, #tpu.memory_space<vmem>>, vector<512x128xf32>
    tpu.vector_store %arg4[%c0_5, %c0_6], %9 {strides = array<i32>} : memref<512x128xf32, #tpu.memory_space<vmem>>, vector<512x128xf32>,
    return
  }
  func.func @transform_0(%arg0: i32) -> (i32, i32) {
    %c0_i32 = arith.constant 0 : i32
    %c0_i32_0 = arith.constant 0 : i32
    return %arg0, %c0_i32 : i32, i32
  }
  func.func @transform_1(%arg0: i32) -> (i32, i32) {
    %c0_i32 = arith.constant 0 : i32
    %c0_i32_0 = arith.constant 0 : i32
    %c0_i32_1 = arith.constant 0 : i32
    return %c0_i32, %c0_i32_0 : i32, i32
  }
  func.func @transform_2(%arg0: i32) -> (i32, i32) {
    %c0_i32 = arith.constant 0 : i32
    %c0_i32_0 = arith.constant 0 : i32
    %c0_i32_1 = arith.constant 0 : i32
    return %c0_i32, %c0_i32_0 : i32, i32
  }
  func.func @transform_3(%arg0: i32) -> (i32, i32) {
    %c0_i32 = arith.constant 0 : i32
    %c0_i32_0 = arith.constant 0 : i32
    return %arg0, %c0_i32 : i32, i32
  }
}

</mosaic_0001>

<llo_original>
// kernel: basic_conv2d.2
$region0: #{basic_conv2d.2}
  #allocation0 [shape = 'u32[]', space=smem, size = 0x4, offset = 0x4, fixed_abs, tag = 'smem constant byte address 0x4 - core index']
  #allocation1 [shape = 'u32[144,128]{1,0:T(1,128)}', space=vmem, size = 0x12000, scoped, tag = 'internal scratch']
  %s0 = inlined_call_operand.vmem [shape: bf16[512,36], index: 0, kind: input, shape index: {}]
  %s1 = inlined_call_operand.vmem [shape: bf16[36,128], index: 1, kind: input, shape index: {}]
  %s2 = inlined_call_operand.vmem [shape: bf16[512,128], index: 2, kind: output, shape index: {0}]
  %s3 = inlined_call_operand.vmem [shape: f32[2,2,128], index: 3, kind: output, shape index: {1}]
  %4 = xla_tuple %s2, %s3
  %s5 = sld [smem:[#allocation0]]
  $region49: #{basic_conv2d.2} parent=0
    _
  %s7 = ssub.s32 1, %s5
  %s8 = scalar_select 0, %s7, %s5
  loop: start=0, step=1, limit=4
  $region2: #{basic_conv2d.2} parent=0 // loop_pre_header
    _
  $region3: #{basic_conv2d.2} parent=0 // loop_header
    %s10 = sphi 0, %s14
    %p11 = scmp.ge.s32.totalorder %s10, 4
    %s20 = sphi 0, %s22
    %s23 = sphi 0, %s20
    %s24 = sphi 0, %s23
    %s40 = sphi 0, %s24
    %s44 = sphi 0, %s44
    %s46 = sphi 0, %s44
    %s47 = sphi 0, %s46
    %s61 = sphi 0, %s47
    %s67 = sphi 0, %s69
    %s70 = sphi 0, %s67
    %s71 = sphi 0, %s70
    %s87 = sphi 0, %s71
    %s93 = sphi 0, %s95
    %s96 = sphi 0, %s93
    %s97 = sphi 0, %s96
    %s113 = sphi 0, %s97
  $region4: #{basic_conv2d.2} parent=0 // loop_header_branch
    %13 = sbr.rel (%p11) target = $region8
  $region5: #{basic_conv2d.2} parent=0 // loop_body
    %s15 = ssub.s32 %s10, 1
    %s16 = ssub.s32 %s10, 2
    %s17 = sadd.s32 %s10, 1
    %s18 = ssub.s32 %s10, %s17
    %p19 = scmp.eq.s32.totalorder %s18, 0
    %s21 = sadd.s32 %s20, 1
    %s22 = scalar_select %p19, %s20, %s21
    %p25 = pneg %p19
    %p26 = scmp.eq.s32.totalorder %s10, 1
    %p27 = por %p25, %p26
    %p28 = scmp.ne.s32.totalorder %s20, %s23
    %p29 = scmp.eq.s32.totalorder %s10, 0
    %p30 = por %p28, %p29
    %p31 = scmp.ne.s32.totalorder %s20, %s23
    %p32 = scmp.eq.s32.totalorder %s15, 1
    %p33 = por %p31, %p32
    %p34 = scmp.ne.s32.totalorder %s23, %s24
    %p35 = scmp.eq.s32.totalorder %s15, 0
    %p36 = por %p34, %p35
    %p37 = scmp.ne.s32.totalorder %s23, %s24
    %p38 = scmp.eq.s32.totalorder %s16, 1
    %p39 = por %p37, %p38
    %p41 = scmp.ne.s32.totalorder %s24, %s40
    %p42 = scmp.eq.s32.totalorder %s16, 0
    %p43 = por %p41, %p42
    %s45 = sadd.s32 %s44, 1
    %p48 = scmp.eq.s32.totalorder %s10, 1
    %p49 = scmp.ne.s32.totalorder %s44, %s46
    %p50 = scmp.eq.s32.totalorder %s10, 0
    %p51 = por %p49, %p50
    %p52 = scmp.ne.s32.totalorder %s44, %s46
    %p53 = scmp.eq.s32.totalorder %s15, 1
    %p54 = por %p52, %p53
    %p55 = scmp.ne.s32.totalorder %s46, %s47
    %p56 = scmp.eq.s32.totalorder %s15, 0
    %p57 = por %p55, %p56
    %p58 = scmp.ne.s32.totalorder %s46, %s47
    %p59 = scmp.eq.s32.totalorder %s16, 1
    %p60 = por %p58, %p59
    %p62 = scmp.ne.s32.totalorder %s47, %s61
    %p63 = scmp.eq.s32.totalorder %s16, 0
    %p64 = por %p62, %p63
    %s65 = ssub.s32 %s10, %s17
    %p66 = scmp.eq.s32.totalorder %s65, 0
    %s68 = sadd.s32 %s67, 1
    %s69 = scalar_select %p66, %s67, %s68
    %p72 = pneg %p66
    %p73 = scmp.eq.s32.totalorder %s10, 1
    %p74 = por %p72, %p73
    %p75 = scmp.ne.s32.totalorder %s67, %s70
    %p76 = scmp.eq.s32.totalorder %s10, 0
    %p77 = por %p75, %p76
    %p78 = scmp.ne.s32.totalorder %s67, %s70
    %p79 = scmp.eq.s32.totalorder %s15, 1
    %p80 = por %p78, %p79
    %p81 = scmp.ne.s32.totalorder %s70, %s71
    %p82 = scmp.eq.s32.totalorder %s15, 0
    %p83 = por %p81, %p82
    %p84 = scmp.ne.s32.totalorder %s70, %s71
    %p85 = scmp.eq.s32.totalorder %s16, 1
    %p86 = por %p84, %p85
    %p88 = scmp.ne.s32.totalorder %s71, %s87
    %p89 = scmp.eq.s32.totalorder %s16, 0
    %p90 = por %p88, %p89
    %s91 = ssub.s32 %s10, %s17
    %p92 = scmp.eq.s32.totalorder %s91, 0
    %s94 = sadd.s32 %s93, 1
    %s95 = scalar_select %p92, %s93, %s94
    %p98 = pneg %p92
    %p99 = scmp.eq.s32.totalorder %s10, 1
    %p100 = por %p98, %p99
    %p101 = scmp.ne.s32.totalorder %s93, %s96
    %p102 = scmp.eq.s32.totalorder %s10, 0
    %p103 = por %p101, %p102
    %p104 = scmp.ne.s32.totalorder %s93, %s96
    %p105 = scmp.eq.s32.totalorder %s15, 1
    %p106 = por %p104, %p105
    %p107 = scmp.ne.s32.totalorder %s96, %s97
    %p108 = scmp.eq.s32.totalorder %s15, 0
    %p109 = por %p107, %p108
    %p110 = scmp.ne.s32.totalorder %s96, %s97
    %p111 = scmp.eq.s32.totalorder %s16, 1
    %p112 = por %p110, %p111
    %p114 = scmp.ne.s32.totalorder %s97, %s113
    %p115 = scmp.eq.s32.totalorder %s16, 0
    %p116 = por %p114, %p115
    %p117 = scmp.le.s32.totalorder 1, %s10
    %p118 = scmp.lt.s32.totalorder %s10, 3
    %p119 = pnand %p117, %p118
    %p120 = pneg %p119
    // Predicated region
    $region9: #{basic_conv2d.2} parent=5 // pred_check
      _
    $region10: #{basic_conv2d.2} parent=5 // pred_check_branch
      %122 = sbr.rel (%p119) target = $region12
    $region11: #{basic_conv2d.2} parent=5 // pred_region
      %s123 = ssub.s32 %s10, 1
      // Predicated region
      $region13: #{basic_conv2d.2} parent=11 // pred_check
        %p124 = pneg %p57
      $region14: #{basic_conv2d.2} parent=11 // pred_check_branch
        %126 = sbr.rel (%p124) target = $region16
      $region15: #{basic_conv2d.2} parent=11 // pred_region
        _
      $region16: #{basic_conv2d.2} parent=11 // pred_fallthru
        _
    $region12: #{basic_conv2d.2} parent=5 // pred_fallthru
      _
    %p127 = scmp.lt.s32.totalorder %s10, 2
    // Predicated region
    $region17: #{basic_conv2d.2} parent=5 // pred_check
      %p128 = pneg %p127
    $region18: #{basic_conv2d.2} parent=5 // pred_check_branch
      %130 = sbr.rel (%p128) target = $region20
    $region19: #{basic_conv2d.2} parent=5 // pred_region
      // Predicated region
      $region21: #{basic_conv2d.2} parent=19 // pred_check
        %p131 = pneg %p30
      $region22: #{basic_conv2d.2} parent=19 // pred_check_branch
        %133 = sbr.rel (%p131) target = $region24
      $region23: #{basic_conv2d.2} parent=19 // pred_region
        %s134 = smul.u32 32, %s10
        %p135 = scmp.lt.s32.totalorder %s134, 63
        %s136 = scalar_select %p135, %s134, 63
        %s137 = smul.addr %s136, 4
        %s138 = scalar_lea.vmem %s0, %s137
        %s139 = smul.u32 32, %s10
      $region24: #{basic_conv2d.2} parent=19 // pred_fallthru
        _
    $region20: #{basic_conv2d.2} parent=5 // pred_fallthru
      _
    %p140 = scmp.le.s32.totalorder 1, %s10
    %p141 = scmp.lt.s32.totalorder %s10, 3
    %p142 = pnand %p140, %p141
    %p143 = pneg %p142
    // Predicated region
    $region25: #{basic_conv2d.2} parent=5 // pred_check
      _
    $region26: #{basic_conv2d.2} parent=5 // pred_check_branch
      %145 = sbr.rel (%p142) target = $region28
    $region27: #{basic_conv2d.2} parent=5 // pred_region
      %s146 = ssub.s32 %s10, 1
      %s147 = smul.u32 32, %s15
      %p148 = scmp.lt.s32.totalorder %s147, 63
      %s149 = scalar_select %p148, %s147, 63
      %s150 = smul.addr %s149, 4
      %s151 = scalar_lea.vmem %s0, %s150
      %p152 = pneg %p36
      %p153 = pneg %p33
      %p154 = pneg %p57
      %p155 = pneg %p54
      %p156 = pneg %p83
      %p157 = pneg %p80
      %s158 = smul.u32 32, %s15
      %p159 = scmp.lt.s32.totalorder %s158, 63
      %s160 = scalar_select %p159, %s158, 63
      %s161 = smul.addr %s160, 4
      %s162 = scalar_lea.vmem %s2, %s161
      %p163 = pneg %p109
      %p164 = pneg %p106
      %p165 = scmp.lt.s32.totalorder %s15, 1
      %s166 = scalar_select %p165, %s15, 1
      %s167 = smul.addr %s166, 2
      %s168 = scalar_lea.vmem %s3, %s167
      %s169 = smul.u32 32, %s15
      %p170 = scmp.lt.s32.totalorder %s169, 63
      %s171 = scalar_select %p170, %s169, 63
      %s172 = smul.addr %s171, 4
      %s173 = scalar_lea.vmem %s0, %s172
      %s174 = smul.u32 32, %s15
      %s175 = smul.u32 32, %s15
      %p176 = scmp.lt.s32.totalorder %s175, 63
      %s177 = scalar_select %p176, %s175, 63
      %s178 = smul.addr %s177, 4
      %s179 = scalar_lea.vmem %s2, %s178
      %s180 = smul.u32 32, %s15
      %p181 = scmp.lt.s32.totalorder %s15, 1
      %s182 = scalar_select %p181, %s15, 1
      %s183 = smul.addr %s182, 2
      %s184 = scalar_lea.vmem %s3, %s183
      %v186 = vld [vmem:[%s173] sm:$0xf]
      %v187 = vld [vmem:[%s173 + $0x4] sm:$0xf]
      %v188 = vld [vmem:[%s173 + $0x8] sm:$0xf]
      %v189 = vld [vmem:[%s173 + $0xc] sm:$0xf]
      %v190 = vld [vmem:[%s173 + $0x10] sm:$0xf]
      %v191 = vld [vmem:[%s173 + $0x14] sm:$0xf]
      %v192 = vld [vmem:[%s173 + $0x18] sm:$0xf]
      %v193 = vld [vmem:[%s173 + $0x1c] sm:$0xf]
      %v194 = vld [vmem:[%s173 + $0x20] sm:$0xf]
      %v195 = vld [vmem:[%s173 + $0x24] sm:$0xf]
      %v196 = vld [vmem:[%s173 + $0x28] sm:$0xf]
      %v197 = vld [vmem:[%s173 + $0x2c] sm:$0xf]
      %v198 = vld [vmem:[%s173 + $0x30] sm:$0xf]
      %v199 = vld [vmem:[%s173 + $0x34] sm:$0xf]
      %v200 = vld [vmem:[%s173 + $0x38] sm:$0xf]
      %v201 = vld [vmem:[%s173 + $0x3c] sm:$0xf]
      %v202 = vld [vmem:[%s173 + $0x40] sm:$0xf]
      %v203 = vld [vmem:[%s173 + $0x44] sm:$0xf]
      %v204 = vld [vmem:[%s173 + $0x48] sm:$0xf]
      %v205 = vld [vmem:[%s173 + $0x4c] sm:$0xf]
      %v206 = vld [vmem:[%s173 + $0x50] sm:$0xf]
      %v207 = vld [vmem:[%s173 + $0x54] sm:$0xf]
      %v208 = vld [vmem:[%s173 + $0x58] sm:$0xf]
      %v209 = vld [vmem:[%s173 + $0x5c] sm:$0xf]
      %v210 = vld [vmem:[%s173 + $0x60] sm:$0xf]
      %v211 = vld [vmem:[%s173 + $0x64] sm:$0xf]
      %v212 = vld [vmem:[%s173 + $0x68] sm:$0xf]
      %v213 = vld [vmem:[%s173 + $0x6c] sm:$0xf]
      %v214 = vld [vmem:[%s173 + $0x70] sm:$0xf]
      %v215 = vld [vmem:[%s173 + $0x74] sm:$0xf]
      %v216 = vld [vmem:[%s173 + $0x78] sm:$0xf]
      %v217 = vld [vmem:[%s173 + $0x7c] sm:$0xf]
      %v218 = vld [vmem:[%s1] sm:$0xf]
      %v219 = vld [vmem:[%s1 + $0x4] sm:$0xf]
      %v220 = vld [vmem:[%s1 + $0x8] sm:$0xf]
      %v221 = vld [vmem:[%s1 + $0xc] sm:$0xf]
      %v222 = vld [vmem:[%s1 + $0x10] sm:$0x3]
      %v255 = vunpack.c.l.b16 %v186
      %v256 = vunpack.c.l.b16 %v187
      %v257 = vunpack.c.l.b16 %v188
      %v258 = vunpack.c.l.b16 %v189
      %v259 = vunpack.c.l.b16 %v190
      %v260 = vunpack.c.l.b16 %v191
      %v261 = vunpack.c.l.b16 %v192
      %v262 = vunpack.c.l.b16 %v193
      %v263 = vunpack.c.l.b16 %v194
      %v264 = vunpack.c.l.b16 %v195
      %v265 = vunpack.c.l.b16 %v196
      %v266 = vunpack.c.l.b16 %v197
      %v267 = vunpack.c.l.b16 %v198
      %v268 = vunpack.c.l.b16 %v199
      %v269 = vunpack.c.l.b16 %v200
      %v270 = vunpack.c.l.b16 %v201
      %v271 = vunpack.c.l.b16 %v202
      %v272 = vunpack.c.l.b16 %v203
      %v273 = vunpack.c.l.b16 %v204
      %v274 = vunpack.c.l.b16 %v205
      %v275 = vunpack.c.l.b16 %v206
      %v276 = vunpack.c.l.b16 %v207
      %v277 = vunpack.c.l.b16 %v208
      %v278 = vunpack.c.l.b16 %v209
      %v279 = vunpack.c.l.b16 %v210
      %v280 = vunpack.c.l.b16 %v211
      %v281 = vunpack.c.l.b16 %v212
      %v282 = vunpack.c.l.b16 %v213
      %v283 = vunpack.c.l.b16 %v214
      %v284 = vunpack.c.l.b16 %v215
      %v285 = vunpack.c.l.b16 %v216
      %v286 = vunpack.c.l.b16 %v217
      %v287 = vpack.c.b16 %v256, %v255
      %v288 = vpack.c.b16 %v258, %v257
      %v289 = vpack.c.b16 %v260, %v259
      %v290 = vpack.c.b16 %v262, %v261
      %v291 = vpack.c.b16 %v264, %v263
      %v292 = vpack.c.b16 %v266, %v265
      %v293 = vpack.c.b16 %v268, %v267
      %v294 = vpack.c.b16 %v270, %v269
      %v295 = vpack.c.b16 %v272, %v271
      %v296 = vpack.c.b16 %v274, %v273
      %v297 = vpack.c.b16 %v276, %v275
      %v298 = vpack.c.b16 %v278, %v277
      %v299 = vpack.c.b16 %v280, %v279
      %v300 = vpack.c.b16 %v282, %v281
      %v301 = vpack.c.b16 %v284, %v283
      %v302 = vpack.c.b16 %v286, %v285
      %v308 = vunpack.c.l.b16 %v218
      %v309 = vunpack.c.l.b16 %v219
      %v310 = vunpack.c.l.b16 %v220
      %v311 = vunpack.c.l.b16 %v221
      %v312 = vunpack.c.l.b16 %v222
      %v313 = vpack.c.b16 %v309, %v308
      %v314 = vpack.c.b16 %v311, %v310
      %v315 = vpack.c.b16 %v312, %v312
      %vm318 = vcmask 293888
      %v320 = vsel %vm318, %v287, 0
      %v323 = vsel %vm318, %v288, 0
      %v326 = vsel %vm318, %v289, 0
      %v329 = vsel %vm318, %v290, 0
      %v332 = vsel %vm318, %v291, 0
      %v335 = vsel %vm318, %v292, 0
      %v338 = vsel %vm318, %v293, 0
      %v341 = vsel %vm318, %v294, 0
      %v344 = vsel %vm318, %v295, 0
      %v347 = vsel %vm318, %v296, 0
      %v350 = vsel %vm318, %v297, 0
      %v353 = vsel %vm318, %v298, 0
      %v356 = vsel %vm318, %v299, 0
      %v359 = vsel %vm318, %v300, 0
      %v362 = vsel %vm318, %v301, 0
      %v365 = vsel %vm318, %v302, 0
      %vm367 = vcmask 1041408
      %v369 = vsel %vm367, %v315, 0
      %371 = vmatprep.subr.bf16.mxu0 0
      %372 = vmatpush1.bf16.msra.mxu0 %v313
      %373 = vmatprep.subr.bf16.mxu0 0
      %374 = vmatpush1.bf16.msra.mxu0 %v314
      %375 = vmatprep.subr.bf16.mxu0 0
      %376 = vmatpush1.bf16.msra.mxu0 %v369
      %377 = vmatprep.subr.bf16.mxu0 0
      %378 = vmatpush1.bf16.msra.mxu0 0
      %379 = vmatprep.subr.bf16.mxu0 0
      %380 = vmatpush1.bf16.msra.mxu0 0
      %381 = vmatprep.subr.bf16.mxu0 0
      %382 = vmatpush1.bf16.msra.mxu0 0
      %383 = vmatprep.subr.bf16.mxu0 0
      %384 = vmatpush1.bf16.msra.mxu0 0
      %385 = vmatprep.subr.bf16.mxu0 0
      %386 = vmatpush1.bf16.msra.mxu0 0
      %387 = vmatprep.subr.bf16.mxu0 0
      %388 = vmatpush1.bf16.msra.mxu0 0
      %389 = vmatprep.subr.bf16.mxu0 0
      %390 = vmatpush1.bf16.msra.mxu0 0
      %391 = vmatprep.subr.bf16.mxu0 0
      %392 = vmatpush1.bf16.msra.mxu0 0
      %393 = vmatprep.subr.bf16.mxu0 0
      %394 = vmatpush1.bf16.msra.mxu0 0
      %395 = vmatprep.subr.bf16.mxu0 0
      %396 = vmatpush1.bf16.msra.mxu0 0
      %397 = vmatprep.subr.bf16.mxu0 0
      %398 = vmatpush1.bf16.msra.mxu0 0
      %399 = vmatprep.subr.bf16.mxu0 0
      %400 = vmatpush1.bf16.msra.mxu0 0
      %401 = vmatprep.subr.bf16.mxu0 0
      %402 = vmatpush1.bf16.msra.mxu0 0
      %403 = vmatprep.mubr.bf16.mxu0 0
      %404 = vmatmul.mubr.bf16.gmra.mrb[0].mxu0 %v320
      %v405 = vpop.f32.mrb[0].mxu0
      %v406 = vadd.f32 0.0, %v405
      %v407 = vpop.f32.mrb[0].mxu0
      %v408 = vpop.f32.mrb[0].mxu0
      %v409 = vadd.f32 0.0, %v408
      %v410 = vpop.f32.mrb[0].mxu0
      %411 = vmatprep.mubr.bf16.mxu0 0
      %412 = vmatmul.mubr.bf16.gmra.mrb[0].mxu0 %v323
      %v413 = vpop.f32.mrb[0].mxu0
      %v414 = vadd.f32 0.0, %v413
      %v415 = vpop.f32.mrb[0].mxu0
      %v416 = vpop.f32.mrb[0].mxu0
      %v417 = vadd.f32 0.0, %v416
      %v418 = vpop.f32.mrb[0].mxu0
      %419 = vmatprep.mubr.bf16.mxu0 0
      %420 = vmatmul.mubr.bf16.gmra.mrb[0].mxu0 %v326
      %v421 = vpop.f32.mrb[0].mxu0
      %v422 = vadd.f32 0.0, %v421
      %v423 = vpop.f32.mrb[0].mxu0
      %v424 = vpop.f32.mrb[0].mxu0
      %v425 = vadd.f32 0.0, %v424
      %v426 = vpop.f32.mrb[0].mxu0
      %427 = vmatprep.mubr.bf16.mxu0 0
      %428 = vmatmul.mubr.bf16.gmra.mrb[0].mxu0 %v329
      %v429 = vpop.f32.mrb[0].mxu0
      %v430 = vadd.f32 0.0, %v429
      %v431 = vpop.f32.mrb[0].mxu0
      %v432 = vpop.f32.mrb[0].mxu0
      %v433 = vadd.f32 0.0, %v432
      %v434 = vpop.f32.mrb[0].mxu0
      %435 = vmatprep.mubr.bf16.mxu0 0
      %436 = vmatmul.mubr.bf16.gmra.mrb[0].mxu0 %v332
      %v437 = vpop.f32.mrb[0].mxu0
      %v438 = vadd.f32 0.0, %v437
      %v439 = vpop.f32.mrb[0].mxu0
      %v440 = vpop.f32.mrb[0].mxu0
      %v441 = vadd.f32 0.0, %v440
      %v442 = vpop.f32.mrb[0].mxu0
      %443 = vmatprep.mubr.bf16.mxu0 0
      %444 = vmatmul.mubr.bf16.gmra.mrb[0].mxu0 %v335
      %v445 = vpop.f32.mrb[0].mxu0
      %v446 = vadd.f32 0.0, %v445
      %v447 = vpop.f32.mrb[0].mxu0
      %v448 = vpop.f32.mrb[0].mxu0
      %v449 = vadd.f32 0.0, %v448
      %v450 = vpop.f32.mrb[0].mxu0
      %451 = vmatprep.mubr.bf16.mxu0 0
      %452 = vmatmul.mubr.bf16.gmra.mrb[0].mxu0 %v338
      %v453 = vpop.f32.mrb[0].mxu0
      %v454 = vadd.f32 0.0, %v453
      %v455 = vpop.f32.mrb[0].mxu0
      %v456 = vpop.f32.mrb[0].mxu0
      %v457 = vadd.f32 0.0, %v456
      %v458 = vpop.f32.mrb[0].mxu0
      %459 = vmatprep.mubr.bf16.mxu0 0
      %460 = vmatmul.mubr.bf16.gmra.mrb[0].mxu0 %v341
      %v461 = vpop.f32.mrb[0].mxu0
      %v462 = vadd.f32 0.0, %v461
      %v463 = vpop.f32.mrb[0].mxu0
      %v464 = vpop.f32.mrb[0].mxu0
      %v465 = vadd.f32 0.0, %v464
      %v466 = vpop.f32.mrb[0].mxu0
      %467 = vmatprep.mubr.bf16.mxu0 0
      %468 = vmatmul.mubr.bf16.gmra.mrb[0].mxu0 %v344
      %v469 = vpop.f32.mrb[0].mxu0
      %v470 = vadd.f32 0.0, %v469
      %v471 = vpop.f32.mrb[0].mxu0
      %v472 = vpop.f32.mrb[0].mxu0
      %v473 = vadd.f32 0.0, %v472
      %v474 = vpop.f32.mrb[0].mxu0
      %475 = vmatprep.mubr.bf16.mxu0 0
      %476 = vmatmul.mubr.bf16.gmra.mrb[0].mxu0 %v347
      %v477 = vpop.f32.mrb[0].mxu0
      %v478 = vadd.f32 0.0, %v477
      %v479 = vpop.f32.mrb[0].mxu0
      %v480 = vpop.f32.mrb[0].mxu0
      %v481 = vadd.f32 0.0, %v480
      %v482 = vpop.f32.mrb[0].mxu0
      %483 = vmatprep.mubr.bf16.mxu0 0
      %484 = vmatmul.mubr.bf16.gmra.mrb[0].mxu0 %v350
      %v485 = vpop.f32.mrb[0].mxu0
      %v486 = vadd.f32 0.0, %v485
      %v487 = vpop.f32.mrb[0].mxu0
      %v488 = vpop.f32.mrb[0].mxu0
      %v489 = vadd.f32 0.0, %v488
      %v490 = vpop.f32.mrb[0].mxu0
      %491 = vmatprep.mubr.bf16.mxu0 0
      %492 = vmatmul.mubr.bf16.gmra.mrb[0].mxu0 %v353
      %v493 = vpop.f32.mrb[0].mxu0
      %v494 = vadd.f32 0.0, %v493
      %v495 = vpop.f32.mrb[0].mxu0
      %v496 = vpop.f32.mrb[0].mxu0
      %v497 = vadd.f32 0.0, %v496
      %v498 = vpop.f32.mrb[0].mxu0
      %499 = vmatprep.mubr.bf16.mxu0 0
      %500 = vmatmul.mubr.bf16.gmra.mrb[0].mxu0 %v356
      %v501 = vpop.f32.mrb[0].mxu0
      %v502 = vadd.f32 0.0, %v501
      %v503 = vpop.f32.mrb[0].mxu0
      %v504 = vpop.f32.mrb[0].mxu0
      %v505 = vadd.f32 0.0, %v504
      %v506 = vpop.f32.mrb[0].mxu0
      %507 = vmatprep.mubr.bf16.mxu0 0
      %508 = vmatmul.mubr.bf16.gmra.mrb[0].mxu0 %v359
      %v509 = vpop.f32.mrb[0].mxu0
      %v510 = vadd.f32 0.0, %v509
      %v511 = vpop.f32.mrb[0].mxu0
      %v512 = vpop.f32.mrb[0].mxu0
      %v513 = vadd.f32 0.0, %v512
      %v514 = vpop.f32.mrb[0].mxu0
      %515 = vmatprep.mubr.bf16.mxu0 0
      %516 = vmatmul.mubr.bf16.gmra.mrb[0].mxu0 %v362
      %v517 = vpop.f32.mrb[0].mxu0
      %v518 = vadd.f32 0.0, %v517
      %v519 = vpop.f32.mrb[0].mxu0
      %v520 = vpop.f32.mrb[0].mxu0
      %v521 = vadd.f32 0.0, %v520
      %v522 = vpop.f32.mrb[0].mxu0
      %523 = vmatprep.mubr.bf16.mxu0 0
      %524 = vmatmul.mubr.bf16.gmra.mrb[0].mxu0 %v365
      %v525 = vpop.f32.mrb[0].mxu0
      %v526 = vadd.f32 0.0, %v525
      %v527 = vpop.f32.mrb[0].mxu0
      %v528 = vpop.f32.mrb[0].mxu0
      %v529 = vadd.f32 0.0, %v528
      %v530 = vpop.f32.mrb[0].mxu0
      %531 = vdwg.mxu0
      %v532 = vpack.c.bf16 %v409, %v406
      %v533 = vpack.c.bf16 %v417, %v414
      %v534 = vpack.c.bf16 %v425, %v422
      %v535 = vpack.c.bf16 %v433, %v430
      %v536 = vpack.c.bf16 %v441, %v438
      %v537 = vpack.c.bf16 %v449, %v446
      %v538 = vpack.c.bf16 %v457, %v454
      %v539 = vpack.c.bf16 %v465, %v462
      %v540 = vpack.c.bf16 %v473, %v470
      %v541 = vpack.c.bf16 %v481, %v478
      %v542 = vpack.c.bf16 %v489, %v486
      %v543 = vpack.c.bf16 %v497, %v494
      %v544 = vpack.c.bf16 %v505, %v502
      %v545 = vpack.c.bf16 %v513, %v510
      %v546 = vpack.c.bf16 %v521, %v518
      %v547 = vpack.c.bf16 %v529, %v526
      %v564 = vunpack.c.l.b16 %v532
      %v565 = vunpack.c.h.b16 %v532
      %v566 = vunpack.c.l.b16 %v533
      %v567 = vunpack.c.h.b16 %v533
      %v568 = vunpack.c.l.b16 %v534
      %v569 = vunpack.c.h.b16 %v534
      %v570 = vunpack.c.l.b16 %v535
      %v571 = vunpack.c.h.b16 %v535
      %v572 = vunpack.c.l.b16 %v536
      %v573 = vunpack.c.h.b16 %v536
      %v574 = vunpack.c.l.b16 %v537
      %v575 = vunpack.c.h.b16 %v537
      %v576 = vunpack.c.l.b16 %v538
      %v577 = vunpack.c.h.b16 %v538
      %v578 = vunpack.c.l.b16 %v539
      %v579 = vunpack.c.h.b16 %v539
      %v580 = vunpack.c.l.b16 %v540
      %v581 = vunpack.c.h.b16 %v540
      %v582 = vunpack.c.l.b16 %v541
      %v583 = vunpack.c.h.b16 %v541
      %v584 = vunpack.c.l.b16 %v542
      %v585 = vunpack.c.h.b16 %v542
      %v586 = vunpack.c.l.b16 %v543
      %v587 = vunpack.c.h.b16 %v543
      %v588 = vunpack.c.l.b16 %v544
      %v589 = vunpack.c.h.b16 %v544
      %v590 = vunpack.c.l.b16 %v545
      %v591 = vunpack.c.h.b16 %v545
      %v592 = vunpack.c.l.b16 %v546
      %v593 = vunpack.c.h.b16 %v546
      %v594 = vunpack.c.l.b16 %v547
      %v595 = vunpack.c.h.b16 %v547
      %v596 = vpack.c.b16 %v564, %v564
      %v597 = vpack.c.b16 %v565, %v565
      %v598 = vpack.c.b16 %v566, %v566
      %v599 = vpack.c.b16 %v567, %v567
      %v600 = vpack.c.b16 %v568, %v568
      %v601 = vpack.c.b16 %v569, %v569
      %v602 = vpack.c.b16 %v570, %v570
      %v603 = vpack.c.b16 %v571, %v571
      %v604 = vpack.c.b16 %v572, %v572
      %v605 = vpack.c.b16 %v573, %v573
      %v606 = vpack.c.b16 %v574, %v574
      %v607 = vpack.c.b16 %v575, %v575
      %v608 = vpack.c.b16 %v576, %v576
      %v609 = vpack.c.b16 %v577, %v577
      %v610 = vpack.c.b16 %v578, %v578
      %v611 = vpack.c.b16 %v579, %v579
      %v612 = vpack.c.b16 %v580, %v580
      %v613 = vpack.c.b16 %v581, %v581
      %v614 = vpack.c.b16 %v582, %v582
      %v615 = vpack.c.b16 %v583, %v583
      %v616 = vpack.c.b16 %v584, %v584
      %v617 = vpack.c.b16 %v585, %v585
      %v618 = vpack.c.b16 %v586, %v586
      %v619 = vpack.c.b16 %v587, %v587
      %v620 = vpack.c.b16 %v588, %v588
      %v621 = vpack.c.b16 %v589, %v589
      %v622 = vpack.c.b16 %v590, %v590
      %v623 = vpack.c.b16 %v591, %v591
      %v624 = vpack.c.b16 %v592, %v592
      %v625 = vpack.c.b16 %v593, %v593
      %v626 = vpack.c.b16 %v594, %v594
      %v627 = vpack.c.b16 %v595, %v595
      %660 = vst [vmem:[%s179] sm:$0xf] %v596
      %661 = vst [vmem:[%s179 + $0x4] sm:$0xf] %v597
      %662 = vst [vmem:[%s179 + $0x8] sm:$0xf] %v598
      %663 = vst [vmem:[%s179 + $0xc] sm:$0xf] %v599
      %664 = vst [vmem:[%s179 + $0x10] sm:$0xf] %v600
      %665 = vst [vmem:[%s179 + $0x14] sm:$0xf] %v601
      %666 = vst [vmem:[%s179 + $0x18] sm:$0xf] %v602
      %667 = vst [vmem:[%s179 + $0x1c] sm:$0xf] %v603
      %668 = vst [vmem:[%s179 + $0x20] sm:$0xf] %v604
      %669 = vst [vmem:[%s179 + $0x24] sm:$0xf] %v605
      %670 = vst [vmem:[%s179 + $0x28] sm:$0xf] %v606
      %671 = vst [vmem:[%s179 + $0x2c] sm:$0xf] %v607
      %672 = vst [vmem:[%s179 + $0x30] sm:$0xf] %v608
      %673 = vst [vmem:[%s179 + $0x34] sm:$0xf] %v609
      %674 = vst [vmem:[%s179 + $0x38] sm:$0xf] %v610
      %675 = vst [vmem:[%s179 + $0x3c] sm:$0xf] %v611
      %676 = vst [vmem:[%s179 + $0x40] sm:$0xf] %v612
      %677 = vst [vmem:[%s179 + $0x44] sm:$0xf] %v613
      %678 = vst [vmem:[%s179 + $0x48] sm:$0xf] %v614
      %679 = vst [vmem:[%s179 + $0x4c] sm:$0xf] %v615
      %680 = vst [vmem:[%s179 + $0x50] sm:$0xf] %v616
      %681 = vst [vmem:[%s179 + $0x54] sm:$0xf] %v617
      %682 = vst [vmem:[%s179 + $0x58] sm:$0xf] %v618
      %683 = vst [vmem:[%s179 + $0x5c] sm:$0xf] %v619
      %684 = vst [vmem:[%s179 + $0x60] sm:$0xf] %v620
      %685 = vst [vmem:[%s179 + $0x64] sm:$0xf] %v621
      %686 = vst [vmem:[%s179 + $0x68] sm:$0xf] %v622
      %687 = vst [vmem:[%s179 + $0x6c] sm:$0xf] %v623
      %688 = vst [vmem:[%s179 + $0x70] sm:$0xf] %v624
      %689 = vst [vmem:[%s179 + $0x74] sm:$0xf] %v625
      %690 = vst [vmem:[%s179 + $0x78] sm:$0xf] %v626
      %691 = vst [vmem:[%s179 + $0x7c] sm:$0xf] %v627
      %v692 = vadd.f32 %v406, %v409
      %v693 = vadd.f32 %v692, %v414
      %v694 = vadd.f32 %v693, %v417
      %v695 = vadd.f32 %v694, %v422
      %v696 = vadd.f32 %v695, %v425
      %v697 = vadd.f32 %v696, %v430
      %v698 = vadd.f32 %v697, %v433
      %v699 = vadd.f32 %v698, %v438
      %v700 = vadd.f32 %v699, %v441
      %v701 = vadd.f32 %v700, %v446
      %v702 = vadd.f32 %v701, %v449
      %v703 = vadd.f32 %v702, %v454
      %v704 = vadd.f32 %v703, %v457
      %v705 = vadd.f32 %v704, %v462
      %v706 = vadd.f32 %v705, %v465
      %v707 = vadd.f32 %v706, %v470
      %v708 = vadd.f32 %v707, %v473
      %v709 = vadd.f32 %v708, %v478
      %v710 = vadd.f32 %v709, %v481
      %v711 = vadd.f32 %v710, %v486
      %v712 = vadd.f32 %v711, %v489
      %v713 = vadd.f32 %v712, %v494
      %v714 = vadd.f32 %v713, %v497
      %v715 = vadd.f32 %v714, %v502
      %v716 = vadd.f32 %v715, %v505
      %v717 = vadd.f32 %v716, %v510
      %v718 = vadd.f32 %v717, %v513
      %v719 = vadd.f32 %v718, %v518
      %v720 = vadd.f32 %v719, %v521
      %v721 = vadd.f32 %v720, %v526
      %v722 = vadd.f32 %v721, %v529
      %v723 = vrot.slane %v722, 4
      %v724 = vadd.f32 %v722, %v723
      %v725 = vrot.slane %v724, 2
      %v726 = vadd.f32 %v724, %v725
      %v727 = vrot.slane %v726, 1
      %v728 = vadd.f32 %v726, %v727
      %v729 = vmul.f32 %v406, %v406
      %v730 = vmul.f32 %v409, %v409
      %v731 = vmul.f32 %v414, %v414
      %v732 = vmul.f32 %v417, %v417
      %v733 = vmul.f32 %v422, %v422
      %v734 = vmul.f32 %v425, %v425
      %v735 = vmul.f32 %v430, %v430
      %v736 = vmul.f32 %v433, %v433
      %v737 = vmul.f32 %v438, %v438
      %v738 = vmul.f32 %v441, %v441
      %v739 = vmul.f32 %v446, %v446
      %v740 = vmul.f32 %v449, %v449
      %v741 = vmul.f32 %v454, %v454
      %v742 = vmul.f32 %v457, %v457
      %v743 = vmul.f32 %v462, %v462
      %v744 = vmul.f32 %v465, %v465
      %v745 = vmul.f32 %v470, %v470
      %v746 = vmul.f32 %v473, %v473
      %v747 = vmul.f32 %v478, %v478
      %v748 = vmul.f32 %v481, %v481
      %v749 = vmul.f32 %v486, %v486
      %v750 = vmul.f32 %v489, %v489
      %v751 = vmul.f32 %v494, %v494
      %v752 = vmul.f32 %v497, %v497
      %v753 = vmul.f32 %v502, %v502
      %v754 = vmul.f32 %v505, %v505
      %v755 = vmul.f32 %v510, %v510
      %v756 = vmul.f32 %v513, %v513
      %v757 = vmul.f32 %v518, %v518
      %v758 = vmul.f32 %v521, %v521
      %v759 = vmul.f32 %v526, %v526
      %v760 = vmul.f32 %v529, %v529
      %v761 = vadd.f32 %v729, %v730
      %v762 = vadd.f32 %v761, %v731
      %v763 = vadd.f32 %v762, %v732
      %v764 = vadd.f32 %v763, %v733
      %v765 = vadd.f32 %v764, %v734
      %v766 = vadd.f32 %v765, %v735
      %v767 = vadd.f32 %v766, %v736
      %v768 = vadd.f32 %v767, %v737
      %v769 = vadd.f32 %v768, %v738
      %v770 = vadd.f32 %v769, %v739
      %v771 = vadd.f32 %v770, %v740
      %v772 = vadd.f32 %v771, %v741
      %v773 = vadd.f32 %v772, %v742
      %v774 = vadd.f32 %v773, %v743
      %v775 = vadd.f32 %v774, %v744
      %v776 = vadd.f32 %v775, %v745
      %v777 = vadd.f32 %v776, %v746
      %v778 = vadd.f32 %v777, %v747
      %v779 = vadd.f32 %v778, %v748
      %v780 = vadd.f32 %v779, %v749
      %v781 = vadd.f32 %v780, %v750
      %v782 = vadd.f32 %v781, %v751
      %v783 = vadd.f32 %v782, %v752
      %v784 = vadd.f32 %v783, %v753
      %v785 = vadd.f32 %v784, %v754
      %v786 = vadd.f32 %v785, %v755
      %v787 = vadd.f32 %v786, %v756
      %v788 = vadd.f32 %v787, %v757
      %v789 = vadd.f32 %v788, %v758
      %v790 = vadd.f32 %v789, %v759
      %v791 = vadd.f32 %v790, %v760
      %v792 = vrot.slane %v791, 4
      %v793 = vadd.f32 %v791, %v792
      %v794 = vrot.slane %v793, 2
      %v795 = vadd.f32 %v793, %v794
      %v796 = vrot.slane %v795, 1
      %v797 = vadd.f32 %v795, %v796
      %vm798 = vcmask 1040384
      %v799 = vsel %vm798, %v728, %v797
      %800 = vst [vmem:[%s184] sm:$0x3] %v799
      %s801 = smul.u32 32, %s15
      %p802 = scmp.lt.s32.totalorder %s801, 63
      %s803 = scalar_select %p802, %s801, 63
      %s804 = smul.addr %s803, 4
      %s805 = scalar_lea.vmem %s2, %s804
      %p806 = scmp.lt.s32.totalorder %s15, 1
      %s807 = scalar_select %p806, %s15, 1
      %s808 = smul.addr %s807, 2
      %s809 = scalar_lea.vmem %s3, %s808
      // Predicated region
      $region29: #{basic_conv2d.2} parent=27 // pred_check
        %p810 = pneg %p80
      $region30: #{basic_conv2d.2} parent=27 // pred_check_branch
        %812 = sbr.rel (%p810) target = $region32
      $region31: #{basic_conv2d.2} parent=27 // pred_region
        %s813 = smul.u32 32, %s15
      $region32: #{basic_conv2d.2} parent=27 // pred_fallthru
        _
      // Predicated region
      $region33: #{basic_conv2d.2} parent=27 // pred_check
        %p814 = pneg %p106
      $region34: #{basic_conv2d.2} parent=27 // pred_check_branch
        %816 = sbr.rel (%p814) target = $region36
      $region35: #{basic_conv2d.2} parent=27 // pred_region
        _
      $region36: #{basic_conv2d.2} parent=27 // pred_fallthru
        _
    $region28: #{basic_conv2d.2} parent=5 // pred_fallthru
      _
    %p817 = scmp.le.s32.totalorder 2, %s10
    // Predicated region
    $region37: #{basic_conv2d.2} parent=5 // pred_check
      %p818 = pneg %p817
    $region38: #{basic_conv2d.2} parent=5 // pred_check_branch
      %820 = sbr.rel (%p818) target = $region40
    $region39: #{basic_conv2d.2} parent=5 // pred_region
      %s821 = ssub.s32 %s10, 2
      // Predicated region
      $region41: #{basic_conv2d.2} parent=39 // pred_check
        %p822 = pneg %p86
      $region42: #{basic_conv2d.2} parent=39 // pred_check_branch
        %824 = sbr.rel (%p822) target = $region44
      $region43: #{basic_conv2d.2} parent=39 // pred_region
        %s825 = smul.u32 32, %s16
        %p826 = scmp.lt.s32.totalorder %s825, 63
        %s827 = scalar_select %p826, %s825, 63
        %s828 = smul.addr %s827, 4
        %s829 = scalar_lea.vmem %s2, %s828
      $region44: #{basic_conv2d.2} parent=39 // pred_fallthru
        _
      // Predicated region
      $region45: #{basic_conv2d.2} parent=39 // pred_check
        %p830 = pneg %p112
      $region46: #{basic_conv2d.2} parent=39 // pred_check_branch
        %832 = sbr.rel (%p830) target = $region48
      $region47: #{basic_conv2d.2} parent=39 // pred_region
        %p833 = scmp.lt.s32.totalorder %s16, 1
        %s834 = scalar_select %p833, %s16, 1
        %s835 = smul.addr %s834, 2
        %s836 = scalar_lea.vmem %s3, %s835
      $region48: #{basic_conv2d.2} parent=39 // pred_fallthru
        _
    $region40: #{basic_conv2d.2} parent=5 // pred_fallthru
      _
  $region6: #{basic_conv2d.2} parent=0 // loop_footer
    %s14 = sadd.s32 1, %s10
  $region7: #{basic_conv2d.2} parent=0 // loop_footer_branch
    %9 = sbr.rel target = $region3
  $region8: #{basic_conv2d.2} parent=0 // loop_exit
    _

// kernel: basic_conv2d.3
$region0: #{basic_conv2d.3}
  #allocation0 [shape = 'u32[]', space=smem, size = 0x4, offset = 0x4, fixed_abs, tag = 'smem constant byte address 0x4 - core index']
  #allocation1 [shape = 'u32[144,128]{1,0:T(1,128)}', space=vmem, size = 0x12000, scoped, tag = 'internal scratch']
  %s0 = inlined_call_operand.vmem [shape: bf16[512,128], index: 0, kind: input, shape index: {}]
  %s1 = inlined_call_operand.vmem [shape: f32[1,128], index: 1, kind: input, shape index: {}]
  %s2 = inlined_call_operand.vmem [shape: f32[1,128], index: 2, kind: input, shape index: {}]
  %s3 = inlined_call_operand.vmem [shape: f32[512,128], index: 3, kind: output, shape index: {}]
  %s4 = sld [smem:[#allocation0]]
  $region22: #{basic_conv2d.3} parent=0
    _
  %s6 = ssub.s32 1, %s4
  %s7 = scalar_select 0, %s6, %s4
  // Predicated region
  $region2: #{basic_conv2d.3} parent=0 // pred_check
    _
  $region3: #{basic_conv2d.3} parent=0 // pred_check_branch
    %9 = sbr.rel (0) target = $region5
  $region4: #{basic_conv2d.3} parent=0 // pred_region
    _
  $region5: #{basic_conv2d.3} parent=0 // pred_fallthru
    _
  // Predicated region
  $region6: #{basic_conv2d.3} parent=0 // pred_check
    _
  $region7: #{basic_conv2d.3} parent=0 // pred_check_branch
    %11 = sbr.rel (0) target = $region9
  $region8: #{basic_conv2d.3} parent=0 // pred_region
    _
  $region9: #{basic_conv2d.3} parent=0 // pred_fallthru
    _
  // Predicated region
  $region10: #{basic_conv2d.3} parent=0 // pred_check
    _
  $region11: #{basic_conv2d.3} parent=0 // pred_check_branch
    %13 = sbr.rel (0) target = $region13
  $region12: #{basic_conv2d.3} parent=0 // pred_region
    _
  $region13: #{basic_conv2d.3} parent=0 // pred_fallthru
    _
  %v14 = vld [vmem:[%s0] sm:$0xf]
  %v15 = vld [vmem:[%s0 + $0x4] sm:$0xf]
  %v16 = vld [vmem:[%s0 + $0x8] sm:$0xf]
  %v17 = vld [vmem:[%s0 + $0xc] sm:$0xf]
  %v18 = vld [vmem:[%s0 + $0x10] sm:$0xf]
  %v19 = vld [vmem:[%s0 + $0x14] sm:$0xf]
  %v20 = vld [vmem:[%s0 + $0x18] sm:$0xf]
  %v21 = vld [vmem:[%s0 + $0x1c] sm:$0xf]
  %v22 = vld [vmem:[%s0 + $0x20] sm:$0xf]
  %v23 = vld [vmem:[%s0 + $0x24] sm:$0xf]
  %v24 = vld [vmem:[%s0 + $0x28] sm:$0xf]
  %v25 = vld [vmem:[%s0 + $0x2c] sm:$0xf]
  %v26 = vld [vmem:[%s0 + $0x30] sm:$0xf]
  %v27 = vld [vmem:[%s0 + $0x34] sm:$0xf]
  %v28 = vld [vmem:[%s0 + $0x38] sm:$0xf]
  %v29 = vld [vmem:[%s0 + $0x3c] sm:$0xf]
  %v30 = vld [vmem:[%s0 + $0x40] sm:$0xf]
  %v31 = vld [vmem:[%s0 + $0x44] sm:$0xf]
  %v32 = vld [vmem:[%s0 + $0x48] sm:$0xf]
  %v33 = vld [vmem:[%s0 + $0x4c] sm:$0xf]
  %v34 = vld [vmem:[%s0 + $0x50] sm:$0xf]
  %v35 = vld [vmem:[%s0 + $0x54] sm:$0xf]
  %v36 = vld [vmem:[%s0 + $0x58] sm:$0xf]
  %v37 = vld [vmem:[%s0 + $0x5c] sm:$0xf]
  %v38 = vld [vmem:[%s0 + $0x60] sm:$0xf]
  %v39 = vld [vmem:[%s0 + $0x64] sm:$0xf]
  %v40 = vld [vmem:[%s0 + $0x68] sm:$0xf]
  %v41 = vld [vmem:[%s0 + $0x6c] sm:$0xf]
  %v42 = vld [vmem:[%s0 + $0x70] sm:$0xf]
  %v43 = vld [vmem:[%s0 + $0x74] sm:$0xf]
  %v44 = vld [vmem:[%s0 + $0x78] sm:$0xf]
  %v45 = vld [vmem:[%s0 + $0x7c] sm:$0xf]
  %v46 = vld [vmem:[%s0 + $0x80] sm:$0xf]
  %v47 = vld [vmem:[%s0 + $0x84] sm:$0xf]
  %v48 = vld [vmem:[%s0 + $0x88] sm:$0xf]
  %v49 = vld [vmem:[%s0 + $0x8c] sm:$0xf]
  %v50 = vld [vmem:[%s0 + $0x90] sm:$0xf]
  %v51 = vld [vmem:[%s0 + $0x94] sm:$0xf]
  %v52 = vld [vmem:[%s0 + $0x98] sm:$0xf]
  %v53 = vld [vmem:[%s0 + $0x9c] sm:$0xf]
  %v54 = vld [vmem:[%s0 + $0xa0] sm:$0xf]
  %v55 = vld [vmem:[%s0 + $0xa4] sm:$0xf]
  %v56 = vld [vmem:[%s0 + $0xa8] sm:$0xf]
  %v57 = vld [vmem:[%s0 + $0xac] sm:$0xf]
  %v58 = vld [vmem:[%s0 + $0xb0] sm:$0xf]
  %v59 = vld [vmem:[%s0 + $0xb4] sm:$0xf]
  %v60 = vld [vmem:[%s0 + $0xb8] sm:$0xf]
  %v61 = vld [vmem:[%s0 + $0xbc] sm:$0xf]
  %v62 = vld [vmem:[%s0 + $0xc0] sm:$0xf]
  %v63 = vld [vmem:[%s0 + $0xc4] sm:$0xf]
  %v64 = vld [vmem:[%s0 + $0xc8] sm:$0xf]
  %v65 = vld [vmem:[%s0 + $0xcc] sm:$0xf]
  %v66 = vld [vmem:[%s0 + $0xd0] sm:$0xf]
  %v67 = vld [vmem:[%s0 + $0xd4] sm:$0xf]
  %v68 = vld [vmem:[%s0 + $0xd8] sm:$0xf]
  %v69 = vld [vmem:[%s0 + $0xdc] sm:$0xf]
  %v70 = vld [vmem:[%s0 + $0xe0] sm:$0xf]
  %v71 = vld [vmem:[%s0 + $0xe4] sm:$0xf]
  %v72 = vld [vmem:[%s0 + $0xe8] sm:$0xf]
  %v73 = vld [vmem:[%s0 + $0xec] sm:$0xf]
  %v74 = vld [vmem:[%s0 + $0xf0] sm:$0xf]
  %v75 = vld [vmem:[%s0 + $0xf4] sm:$0xf]
  %v76 = vld [vmem:[%s0 + $0xf8] sm:$0xf]
  %v77 = vld [vmem:[%s0 + $0xfc] sm:$0xf]
  %v78 = vunpack.c.l.bf16 %v14
  %v79 = vunpack.c.l.bf16 %v15
  %v80 = vunpack.c.l.bf16 %v16
  %v81 = vunpack.c.l.bf16 %v17
  %v82 = vunpack.c.l.bf16 %v18
  %v83 = vunpack.c.l.bf16 %v19
  %v84 = vunpack.c.l.bf16 %v20
  %v85 = vunpack.c.l.bf16 %v21
  %v86 = vunpack.c.l.bf16 %v22
  %v87 = vunpack.c.l.bf16 %v23
  %v88 = vunpack.c.l.bf16 %v24
  %v89 = vunpack.c.l.bf16 %v25
  %v90 = vunpack.c.l.bf16 %v26
  %v91 = vunpack.c.l.bf16 %v27
  %v92 = vunpack.c.l.bf16 %v28
  %v93 = vunpack.c.l.bf16 %v29
  %v94 = vunpack.c.l.bf16 %v30
  %v95 = vunpack.c.l.bf16 %v31
  %v96 = vunpack.c.l.bf16 %v32
  %v97 = vunpack.c.l.bf16 %v33
  %v98 = vunpack.c.l.bf16 %v34
  %v99 = vunpack.c.l.bf16 %v35
  %v100 = vunpack.c.l.bf16 %v36
  %v101 = vunpack.c.l.bf16 %v37
  %v102 = vunpack.c.l.bf16 %v38
  %v103 = vunpack.c.l.bf16 %v39
  %v104 = vunpack.c.l.bf16 %v40
  %v105 = vunpack.c.l.bf16 %v41
  %v106 = vunpack.c.l.bf16 %v42
  %v107 = vunpack.c.l.bf16 %v43
  %v108 = vunpack.c.l.bf16 %v44
  %v109 = vunpack.c.l.bf16 %v45
  %v110 = vunpack.c.l.bf16 %v46
  %v111 = vunpack.c.l.bf16 %v47
  %v112 = vunpack.c.l.bf16 %v48
  %v113 = vunpack.c.l.bf16 %v49
  %v114 = vunpack.c.l.bf16 %v50
  %v115 = vunpack.c.l.bf16 %v51
  %v116 = vunpack.c.l.bf16 %v52
  %v117 = vunpack.c.l.bf16 %v53
  %v118 = vunpack.c.l.bf16 %v54
  %v119 = vunpack.c.l.bf16 %v55
  %v120 = vunpack.c.l.bf16 %v56
  %v121 = vunpack.c.l.bf16 %v57
  %v122 = vunpack.c.l.bf16 %v58
  %v123 = vunpack.c.l.bf16 %v59
  %v124 = vunpack.c.l.bf16 %v60
  %v125 = vunpack.c.l.bf16 %v61
  %v126 = vunpack.c.l.bf16 %v62
  %v127 = vunpack.c.l.bf16 %v63
  %v128 = vunpack.c.l.bf16 %v64
  %v129 = vunpack.c.l.bf16 %v65
  %v130 = vunpack.c.l.bf16 %v66
  %v131 = vunpack.c.l.bf16 %v67
  %v132 = vunpack.c.l.bf16 %v68
  %v133 = vunpack.c.l.bf16 %v69
  %v134 = vunpack.c.l.bf16 %v70
  %v135 = vunpack.c.l.bf16 %v71
  %v136 = vunpack.c.l.bf16 %v72
  %v137 = vunpack.c.l.bf16 %v73
  %v138 = vunpack.c.l.bf16 %v74
  %v139 = vunpack.c.l.bf16 %v75
  %v140 = vunpack.c.l.bf16 %v76
  %v141 = vunpack.c.l.bf16 %v77
  %v142 = vld [vmem:[%s1] sm:$0x1]
  %v144 = vlaneseq
  %v145 = vshrl.u32 %v144, 7
  %v146 = vsub.s32 0, %v145
  %v147 = vrot.slane %v142, %v146
  %v149 = vmul.f32 %v78, %v147
  %v150 = vmul.f32 %v79, %v147
  %v151 = vmul.f32 %v80, %v147
  %v152 = vmul.f32 %v81, %v147
  %v153 = vmul.f32 %v82, %v147
  %v154 = vmul.f32 %v83, %v147
  %v155 = vmul.f32 %v84, %v147
  %v156 = vmul.f32 %v85, %v147
  %v157 = vmul.f32 %v86, %v147
  %v158 = vmul.f32 %v87, %v147
  %v159 = vmul.f32 %v88, %v147
  %v160 = vmul.f32 %v89, %v147
  %v161 = vmul.f32 %v90, %v147
  %v162 = vmul.f32 %v91, %v147
  %v163 = vmul.f32 %v92, %v147
  %v164 = vmul.f32 %v93, %v147
  %v165 = vmul.f32 %v94, %v147
  %v166 = vmul.f32 %v95, %v147
  %v167 = vmul.f32 %v96, %v147
  %v168 = vmul.f32 %v97, %v147
  %v169 = vmul.f32 %v98, %v147
  %v170 = vmul.f32 %v99, %v147
  %v171 = vmul.f32 %v100, %v147
  %v172 = vmul.f32 %v101, %v147
  %v173 = vmul.f32 %v102, %v147
  %v174 = vmul.f32 %v103, %v147
  %v175 = vmul.f32 %v104, %v147
  %v176 = vmul.f32 %v105, %v147
  %v177 = vmul.f32 %v106, %v147
  %v178 = vmul.f32 %v107, %v147
  %v179 = vmul.f32 %v108, %v147
  %v180 = vmul.f32 %v109, %v147
  %v181 = vmul.f32 %v110, %v147
  %v182 = vmul.f32 %v111, %v147
  %v183 = vmul.f32 %v112, %v147
  %v184 = vmul.f32 %v113, %v147
  %v185 = vmul.f32 %v114, %v147
  %v186 = vmul.f32 %v115, %v147
  %v187 = vmul.f32 %v116, %v147
  %v188 = vmul.f32 %v117, %v147
  %v189 = vmul.f32 %v118, %v147
  %v190 = vmul.f32 %v119, %v147
  %v191 = vmul.f32 %v120, %v147
  %v192 = vmul.f32 %v121, %v147
  %v193 = vmul.f32 %v122, %v147
  %v194 = vmul.f32 %v123, %v147
  %v195 = vmul.f32 %v124, %v147
  %v196 = vmul.f32 %v125, %v147
  %v197 = vmul.f32 %v126, %v147
  %v198 = vmul.f32 %v127, %v147
  %v199 = vmul.f32 %v128, %v147
  %v200 = vmul.f32 %v129, %v147
  %v201 = vmul.f32 %v130, %v147
  %v202 = vmul.f32 %v131, %v147
  %v203 = vmul.f32 %v132, %v147
  %v204 = vmul.f32 %v133, %v147
  %v205 = vmul.f32 %v134, %v147
  %v206 = vmul.f32 %v135, %v147
  %v207 = vmul.f32 %v136, %v147
  %v208 = vmul.f32 %v137, %v147
  %v209 = vmul.f32 %v138, %v147
  %v210 = vmul.f32 %v139, %v147
  %v211 = vmul.f32 %v140, %v147
  %v212 = vmul.f32 %v141, %v147
  %v213 = vld [vmem:[%s2] sm:$0x1]
  %v215 = vlaneseq
  %v216 = vshrl.u32 %v215, 7
  %v217 = vsub.s32 0, %v216
  %v218 = vrot.slane %v213, %v217
  %v220 = vadd.f32 %v149, %v218
  %v221 = vadd.f32 %v150, %v218
  %v222 = vadd.f32 %v151, %v218
  %v223 = vadd.f32 %v152, %v218
  %v224 = vadd.f32 %v153, %v218
  %v225 = vadd.f32 %v154, %v218
  %v226 = vadd.f32 %v155, %v218
  %v227 = vadd.f32 %v156, %v218
  %v228 = vadd.f32 %v157, %v218
  %v229 = vadd.f32 %v158, %v218
  %v230 = vadd.f32 %v159, %v218
  %v231 = vadd.f32 %v160, %v218
  %v232 = vadd.f32 %v161, %v218
  %v233 = vadd.f32 %v162, %v218
  %v234 = vadd.f32 %v163, %v218
  %v235 = vadd.f32 %v164, %v218
  %v236 = vadd.f32 %v165, %v218
  %v237 = vadd.f32 %v166, %v218
  %v238 = vadd.f32 %v167, %v218
  %v239 = vadd.f32 %v168, %v218
  %v240 = vadd.f32 %v169, %v218
  %v241 = vadd.f32 %v170, %v218
  %v242 = vadd.f32 %v171, %v218
  %v243 = vadd.f32 %v172, %v218
  %v244 = vadd.f32 %v173, %v218
  %v245 = vadd.f32 %v174, %v218
  %v246 = vadd.f32 %v175, %v218
  %v247 = vadd.f32 %v176, %v218
  %v248 = vadd.f32 %v177, %v218
  %v249 = vadd.f32 %v178, %v218
  %v250 = vadd.f32 %v179, %v218
  %v251 = vadd.f32 %v180, %v218
  %v252 = vadd.f32 %v181, %v218
  %v253 = vadd.f32 %v182, %v218
  %v254 = vadd.f32 %v183, %v218
  %v255 = vadd.f32 %v184, %v218
  %v256 = vadd.f32 %v185, %v218
  %v257 = vadd.f32 %v186, %v218
  %v258 = vadd.f32 %v187, %v218
  %v259 = vadd.f32 %v188, %v218
  %v260 = vadd.f32 %v189, %v218
  %v261 = vadd.f32 %v190, %v218
  %v262 = vadd.f32 %v191, %v218
  %v263 = vadd.f32 %v192, %v218
  %v264 = vadd.f32 %v193, %v218
  %v265 = vadd.f32 %v194, %v218
  %v266 = vadd.f32 %v195, %v218
  %v267 = vadd.f32 %v196, %v218
  %v268 = vadd.f32 %v197, %v218
  %v269 = vadd.f32 %v198, %v218
  %v270 = vadd.f32 %v199, %v218
  %v271 = vadd.f32 %v200, %v218
  %v272 = vadd.f32 %v201, %v218
  %v273 = vadd.f32 %v202, %v218
  %v274 = vadd.f32 %v203, %v218
  %v275 = vadd.f32 %v204, %v218
  %v276 = vadd.f32 %v205, %v218
  %v277 = vadd.f32 %v206, %v218
  %v278 = vadd.f32 %v207, %v218
  %v279 = vadd.f32 %v208, %v218
  %v280 = vadd.f32 %v209, %v218
  %v281 = vadd.f32 %v210, %v218
  %v282 = vadd.f32 %v211, %v218
  %v283 = vadd.f32 %v212, %v218
  %v284 = vmax.f32 %v220, 0.0
  %v285 = vmax.f32 %v221, 0.0
  %v286 = vmax.f32 %v222, 0.0
  %v287 = vmax.f32 %v223, 0.0
  %v288 = vmax.f32 %v224, 0.0
  %v289 = vmax.f32 %v225, 0.0
  %v290 = vmax.f32 %v226, 0.0
  %v291 = vmax.f32 %v227, 0.0
  %v292 = vmax.f32 %v228, 0.0
  %v293 = vmax.f32 %v229, 0.0
  %v294 = vmax.f32 %v230, 0.0
  %v295 = vmax.f32 %v231, 0.0
  %v296 = vmax.f32 %v232, 0.0
  %v297 = vmax.f32 %v233, 0.0
  %v298 = vmax.f32 %v234, 0.0
  %v299 = vmax.f32 %v235, 0.0
  %v300 = vmax.f32 %v236, 0.0
  %v301 = vmax.f32 %v237, 0.0
  %v302 = vmax.f32 %v238, 0.0
  %v303 = vmax.f32 %v239, 0.0
  %v304 = vmax.f32 %v240, 0.0
  %v305 = vmax.f32 %v241, 0.0
  %v306 = vmax.f32 %v242, 0.0
  %v307 = vmax.f32 %v243, 0.0
  %v308 = vmax.f32 %v244, 0.0
  %v309 = vmax.f32 %v245, 0.0
  %v310 = vmax.f32 %v246, 0.0
  %v311 = vmax.f32 %v247, 0.0
  %v312 = vmax.f32 %v248, 0.0
  %v313 = vmax.f32 %v249, 0.0
  %v314 = vmax.f32 %v250, 0.0
  %v315 = vmax.f32 %v251, 0.0
  %v316 = vmax.f32 %v252, 0.0
  %v317 = vmax.f32 %v253, 0.0
  %v318 = vmax.f32 %v254, 0.0
  %v319 = vmax.f32 %v255, 0.0
  %v320 = vmax.f32 %v256, 0.0
  %v321 = vmax.f32 %v257, 0.0
  %v322 = vmax.f32 %v258, 0.0
  %v323 = vmax.f32 %v259, 0.0
  %v324 = vmax.f32 %v260, 0.0
  %v325 = vmax.f32 %v261, 0.0
  %v326 = vmax.f32 %v262, 0.0
  %v327 = vmax.f32 %v263, 0.0
  %v328 = vmax.f32 %v264, 0.0
  %v329 = vmax.f32 %v265, 0.0
  %v330 = vmax.f32 %v266, 0.0
  %v331 = vmax.f32 %v267, 0.0
  %v332 = vmax.f32 %v268, 0.0
  %v333 = vmax.f32 %v269, 0.0
  %v334 = vmax.f32 %v270, 0.0
  %v335 = vmax.f32 %v271, 0.0
  %v336 = vmax.f32 %v272, 0.0
  %v337 = vmax.f32 %v273, 0.0
  %v338 = vmax.f32 %v274, 0.0
  %v339 = vmax.f32 %v275, 0.0
  %v340 = vmax.f32 %v276, 0.0
  %v341 = vmax.f32 %v277, 0.0
  %v342 = vmax.f32 %v278, 0.0
  %v343 = vmax.f32 %v279, 0.0
  %v344 = vmax.f32 %v280, 0.0
  %v345 = vmax.f32 %v281, 0.0
  %v346 = vmax.f32 %v282, 0.0
  %v347 = vmax.f32 %v283, 0.0
  %348 = vst [vmem:[%s3] sm:$0xff] %v284
  %349 = vst [vmem:[%s3 + $0x8] sm:$0xff] %v285
  %350 = vst [vmem:[%s3 + $0x10] sm:$0xff] %v286
  %351 = vst [vmem:[%s3 + $0x18] sm:$0xff] %v287
  %352 = vst [vmem:[%s3 + $0x20] sm:$0xff] %v288
  %353 = vst [vmem:[%s3 + $0x28] sm:$0xff] %v289
  %354 = vst [vmem:[%s3 + $0x30] sm:$0xff] %v290
  %355 = vst [vmem:[%s3 + $0x38] sm:$0xff] %v291
  %356 = vst [vmem:[%s3 + $0x40] sm:$0xff] %v292
  %357 = vst [vmem:[%s3 + $0x48] sm:$0xff] %v293
  %358 = vst [vmem:[%s3 + $0x50] sm:$0xff] %v294
  %359 = vst [vmem:[%s3 + $0x58] sm:$0xff] %v295
  %360 = vst [vmem:[%s3 + $0x60] sm:$0xff] %v296
  %361 = vst [vmem:[%s3 + $0x68] sm:$0xff] %v297
  %362 = vst [vmem:[%s3 + $0x70] sm:$0xff] %v298
  %363 = vst [vmem:[%s3 + $0x78] sm:$0xff] %v299
  %364 = vst [vmem:[%s3 + $0x80] sm:$0xff] %v300
  %365 = vst [vmem:[%s3 + $0x88] sm:$0xff] %v301
  %366 = vst [vmem:[%s3 + $0x90] sm:$0xff] %v302
  %367 = vst [vmem:[%s3 + $0x98] sm:$0xff] %v303
  %368 = vst [vmem:[%s3 + $0xa0] sm:$0xff] %v304
  %369 = vst [vmem:[%s3 + $0xa8] sm:$0xff] %v305
  %370 = vst [vmem:[%s3 + $0xb0] sm:$0xff] %v306
  %371 = vst [vmem:[%s3 + $0xb8] sm:$0xff] %v307
  %372 = vst [vmem:[%s3 + $0xc0] sm:$0xff] %v308
  %373 = vst [vmem:[%s3 + $0xc8] sm:$0xff] %v309
  %374 = vst [vmem:[%s3 + $0xd0] sm:$0xff] %v310
  %375 = vst [vmem:[%s3 + $0xd8] sm:$0xff] %v311
  %376 = vst [vmem:[%s3 + $0xe0] sm:$0xff] %v312
  %377 = vst [vmem:[%s3 + $0xe8] sm:$0xff] %v313
  %378 = vst [vmem:[%s3 + $0xf0] sm:$0xff] %v314
  %379 = vst [vmem:[%s3 + $0xf8] sm:$0xff] %v315
  %380 = vst [vmem:[%s3 + $0x100] sm:$0xff] %v316
  %381 = vst [vmem:[%s3 + $0x108] sm:$0xff] %v317
  %382 = vst [vmem:[%s3 + $0x110] sm:$0xff] %v318
  %383 = vst [vmem:[%s3 + $0x118] sm:$0xff] %v319
  %384 = vst [vmem:[%s3 + $0x120] sm:$0xff] %v320
  %385 = vst [vmem:[%s3 + $0x128] sm:$0xff] %v321
  %386 = vst [vmem:[%s3 + $0x130] sm:$0xff] %v322
  %387 = vst [vmem:[%s3 + $0x138] sm:$0xff] %v323
  %388 = vst [vmem:[%s3 + $0x140] sm:$0xff] %v324
  %389 = vst [vmem:[%s3 + $0x148] sm:$0xff] %v325
  %390 = vst [vmem:[%s3 + $0x150] sm:$0xff] %v326
  %391 = vst [vmem:[%s3 + $0x158] sm:$0xff] %v327
  %392 = vst [vmem:[%s3 + $0x160] sm:$0xff] %v328
  %393 = vst [vmem:[%s3 + $0x168] sm:$0xff] %v329
  %394 = vst [vmem:[%s3 + $0x170] sm:$0xff] %v330
  %395 = vst [vmem:[%s3 + $0x178] sm:$0xff] %v331
  %396 = vst [vmem:[%s3 + $0x180] sm:$0xff] %v332
  %397 = vst [vmem:[%s3 + $0x188] sm:$0xff] %v333
  %398 = vst [vmem:[%s3 + $0x190] sm:$0xff] %v334
  %399 = vst [vmem:[%s3 + $0x198] sm:$0xff] %v335
  %400 = vst [vmem:[%s3 + $0x1a0] sm:$0xff] %v336
  %401 = vst [vmem:[%s3 + $0x1a8] sm:$0xff] %v337
  %402 = vst [vmem:[%s3 + $0x1b0] sm:$0xff] %v338
  %403 = vst [vmem:[%s3 + $0x1b8] sm:$0xff] %v339
  %404 = vst [vmem:[%s3 + $0x1c0] sm:$0xff] %v340
  %405 = vst [vmem:[%s3 + $0x1c8] sm:$0xff] %v341
  %406 = vst [vmem:[%s3 + $0x1d0] sm:$0xff] %v342
  %407 = vst [vmem:[%s3 + $0x1d8] sm:$0xff] %v343
  %408 = vst [vmem:[%s3 + $0x1e0] sm:$0xff] %v344
  %409 = vst [vmem:[%s3 + $0x1e8] sm:$0xff] %v345
  %410 = vst [vmem:[%s3 + $0x1f0] sm:$0xff] %v346
  %411 = vst [vmem:[%s3 + $0x1f8] sm:$0xff] %v347
  // Predicated region
  $region14: #{basic_conv2d.3} parent=0 // pred_check
    _
  $region15: #{basic_conv2d.3} parent=0 // pred_check_branch
    %413 = sbr.rel (0) target = $region17
  $region16: #{basic_conv2d.3} parent=0 // pred_region
    _
  $region17: #{basic_conv2d.3} parent=0 // pred_fallthru
    _
  // Predicated region
  $region18: #{basic_conv2d.3} parent=0 // pred_check
    _
  $region19: #{basic_conv2d.3} parent=0 // pred_check_branch
    %415 = sbr.rel (0) target = $region21
  $region20: #{basic_conv2d.3} parent=0 // pred_region
    _
  $region21: #{basic_conv2d.3} parent=0 // pred_fallthru
    _

</llo_original>
